<compile_context>
chip_gen: v7x
topology: tpu7x:2x2x1
jax: 0.10.0
libtpu: 0.0.40
codegen_flags: <defaults>
</compile_context>

<pallas_src>
import functools

import jax
import jax.numpy as jnp
import numpy as np
from jax import lax
from jax.experimental import pallas as pl
from jax.experimental.pallas import tpu as pltpu

EPS = 1e-5          # nn.BatchNorm2d default eps
NEG_SLOPE = 0.1     # F.leaky_relu negative slope
LANE = 128


def _round_up(x, m):
    return ((x + m - 1) // m) * m


# ---------------------------------------------------------------------------
# Phase 1: tiled conv matmul + per-tile partial BatchNorm statistics.
# ---------------------------------------------------------------------------
def _write_stats(stats_ref, acc):
    s1 = jnp.sum(acc, axis=0, keepdims=True)           # (1, Cp)
    s2 = jnp.sum(acc * acc, axis=0, keepdims=True)     # (1, Cp)
    stats_ref[...] = jnp.concatenate([s1, s2], axis=0)[None]


def _conv_stats_kernel(p_ref, w_ref, y_ref, stats_ref, *, single_k):
    # bf16 x bf16 -> f32 on the MXU; the f32 output block (same block index for
    # every k) doubles as the accumulator, so no extra VMEM scratch is needed.
    dot = jnp.dot(p_ref[...], w_ref[...], preferred_element_type=jnp.float32)

    if single_k:
        # Single K block: write-only path, statistics straight from registers.
        y_ref[...] = dot
        _write_stats(stats_ref, dot)
    else:
        k = pl.program_id(1)

        @pl.when(k == 0)
        def _():
            y_ref[...] = jnp.zeros_like(y_ref)

        acc = y_ref[...] + dot
        y_ref[...] = acc

        @pl.when(k == pl.num_programs(1) - 1)
        def _():
            _write_stats(stats_ref, acc)   # reuse the register value, no re-read


# ---------------------------------------------------------------------------
# Phase 2: folded BatchNorm affine + LeakyReLU, tiled over M (in-place on y).
# ---------------------------------------------------------------------------
def _bn_lrelu_kernel(y_ref, scale_ref, shift_ref, o_ref):
    z = y_ref[...] * scale_ref[...] + shift_ref[...]
    o_ref[...] = jnp.where(z >= 0, z, NEG_SLOPE * z).astype(o_ref.dtype)


def _im2col_nhwc(x_nhwc, size, stride, pad):
    """(kh, kw, cin)-ordered patches; returns (N*Ho*Wo, size*size*Cin), Ho, Wo."""
    N, H, W, C = x_nhwc.shape
    xp = jnp.pad(x_nhwc, ((0, 0), (pad, pad), (pad, pad), (0, 0)))
    Ho = (H + 2 * pad - size) // stride + 1
    Wo = (W + 2 * pad - size) // stride + 1
    patches = []
    for i in range(size):
        for j in range(size):
            patches.append(
                xp[:, i:i + stride * Ho:stride, j:j + stride * Wo:stride, :])
    P = jnp.stack(patches, axis=3)                 # (N, Ho, Wo, size*size, C)
    P = P.reshape(N * Ho * Wo, size * size * C)    # (M, K)
    return P, Ho, Wo


@functools.partial(jax.jit, static_argnames=("size", "stride", "tm", "tk"))
def darknet_conv(x_nchw, weight_oihw, gamma, beta, *, size, stride=1,
                 tm=512, tk=1024):
    """DarknetConv forward pass.  x is NCHW (PyTorch convention)."""
    N, Cin, H, W = x_nchw.shape
    Cout = weight_oihw.shape[0]
    pad = (size - 1) // 2

    # Glue: NCHW -> NHWC (bf16), im2col, weight packed to (K, Cout) bf16.
    # TODO(synk): fold the (kh, kw) shifts into the kernel grid to avoid
    # materializing the size^2-inflated im2col matrix in HBM.
    x_nhwc = jnp.transpose(x_nchw, (0, 2, 3, 1)).astype(jnp.bfloat16)
    P, Ho, Wo = _im2col_nhwc(x_nhwc, size, stride, pad)        # (M, K) bf16
    K = size * size * Cin
    M = N * Ho * Wo
    W_mat = jnp.transpose(weight_oihw, (2, 3, 1, 0)).reshape(K, Cout)
    W_mat = W_mat.astype(jnp.bfloat16)

    # Tiling / lane-dense padding.
    Cp = _round_up(Cout, LANE)                 # lane-dense output channels
    tm = _round_up(tm, 8)
    TM = min(tm, _round_up(M, 8))
    Mp = _round_up(M, TM)
    if K <= tk:
        TK, Kp = K, K                          # single K block, no K padding
    else:
        TK = _round_up(tk, LANE)               # lane-aligned K tiles
        Kp = _round_up(K, TK)
    Gm, Gk = Mp // TM, Kp // TK
    single_k = (Gk == 1)

    P = jnp.pad(P, ((0, Mp - M), (0, Kp - K)))
    W_mat = jnp.pad(W_mat, ((0, Kp - K), (0, Cp - Cout)))

    # ---- phase 1: conv + per-tile partial statistics ----
    cost1 = pl.CostEstimate(
        flops=2 * Mp * Kp * Cp,
        transcendentals=0,
        bytes_accessed=P.size * 2 + W_mat.size * 2 * Gm + Mp * Cp * 4)
    y, part = pl.pallas_call(
        functools.partial(_conv_stats_kernel, single_k=single_k),
        out_shape=(jax.ShapeDtypeStruct((Mp, Cp), jnp.float32),
                   jax.ShapeDtypeStruct((Gm, 2, Cp), jnp.float32)),
        grid=(Gm, Gk),
        in_specs=[
            pl.BlockSpec((TM, TK), lambda i, k: (i, k)),
            pl.BlockSpec((TK, Cp), lambda i, k: (k, 0)),
        ],
        out_specs=(
            pl.BlockSpec((TM, Cp), lambda i, k: (i, 0)),
            pl.BlockSpec((1, 2, Cp), lambda i, k: (i, 0, 0)),
        ),
        compiler_params=pltpu.CompilerParams(
            dimension_semantics=("parallel", "arbitrary"),
            vmem_limit_bytes=32 << 20),
        cost_estimate=cost1,
    )(P, W_mat)

    # Glue: O(Cout) cross-tile reduction + BN scale/shift folding (training
    # statistics: mean and *biased* variance over the real M rows).
    stats = jnp.sum(part, axis=0)                          # (2, Cp) f32
    inv_count = 1.0 / M
    mean = stats[0] * inv_count
    var = stats[1] * inv_count - mean * mean               # biased variance
    inv = lax.rsqrt(var + EPS)
    gamma_p = jnp.pad(gamma.astype(jnp.float32), (0, Cp - Cout))
    beta_p = jnp.pad(beta.astype(jnp.float32), (0, Cp - Cout))
    scale = (inv * gamma_p).reshape(1, Cp)
    shift = (beta_p - mean * inv * gamma_p).reshape(1, Cp)

    # ---- phase 2: folded BN affine + LeakyReLU (in place over y) ----
    cost2 = pl.CostEstimate(flops=3 * Mp * Cp, transcendentals=0,
                            bytes_accessed=2 * Mp * Cp * 4)
    out = pl.pallas_call(
        _bn_lrelu_kernel,
        out_shape=jax.ShapeDtypeStruct((Mp, Cp), jnp.float32),
        grid=(Gm,),
        in_specs=[
            pl.BlockSpec((TM, Cp), lambda i: (i, 0)),
            pl.BlockSpec((1, Cp), lambda i: (0, 0)),
            pl.BlockSpec((1, Cp), lambda i: (0, 0)),
        ],
        out_specs=pl.BlockSpec((TM, Cp), lambda i: (i, 0)),
        input_output_aliases={0: 0},           # reuse the conv buffer in place
        compiler_params=pltpu.CompilerParams(
            dimension_semantics=("parallel",),
            vmem_limit_bytes=32 << 20),
        cost_estimate=cost2,
    )(y, scale, shift)

    # Glue: drop padding, (M, Cout) -> NHWC -> NCHW.
    out = out[:M, :Cout].reshape(N, Ho, Wo, Cout)
    return jnp.transpose(out, (0, 3, 1, 2))


def _reference(x_nchw, weight_oihw, gamma, beta, *, size, stride=1):
    """Pure-JAX reference.  Conv inputs rounded to bf16 to mirror the MXU path
    (f32 accumulation in both cases); everything else in f32."""
    pad = (size - 1) // 2
    xb = x_nchw.astype(jnp.bfloat16).astype(jnp.float32)
    wb = weight_oihw.astype(jnp.bfloat16).astype(jnp.float32)
    y = lax.conv_general_dilated(
        xb, wb, window_strides=(stride, stride),
        padding=[(pad, pad), (pad, pad)],
        dimension_numbers=("NCHW", "OIHW", "NCHW"))
    mean = jnp.mean(y, axis=(0, 2, 3), keepdims=True)
    var = jnp.var(y, axis=(0, 2, 3), keepdims=True)        # biased (training BN)
    yhat = (y - mean) / jnp.sqrt(var + EPS)
    yhat = yhat * gamma.reshape(1, -1, 1, 1) + beta.reshape(1, -1, 1, 1)
    return jnp.where(yhat >= 0, yhat, NEG_SLOPE * yhat)


if __name__ == "__main__":
    root = jax.random.PRNGKey(0)
    configs = [
        # (N, Cin, H, W, Cout, size, stride, tm,  tk)
        (2, 4, 16, 16, 8, 3, 1, 256, 1024),    # toy DarknetConv shape, Gm=2
        (2, 16, 15, 15, 24, 3, 1, 256, 128),   # M/K/Cout padding, Gk=2 reduction
        (2, 8, 16, 16, 16, 3, 2, 512, 1024),   # stride-2 path
    ]
    for idx, (N, Cin, H, W, Cout, size, stride, tm, tk) in enumerate(configs):
        kx, kw, kg, kb = jax.random.split(jax.random.fold_in(root, idx), 4)
        x = jax.random.normal(kx, (N, Cin, H, W), dtype=jnp.float32)
        weight = jax.random.normal(kw, (Cout, Cin, size, size),
                                   dtype=jnp.float32) * 0.1
        gamma = 1.0 + 0.1 * jax.random.normal(kg, (Cout,), dtype=jnp.float32)
        beta = 0.1 * jax.random.normal(kb, (Cout,), dtype=jnp.float32)

        out = darknet_conv(x, weight, gamma, beta, size=size, stride=stride,
                           tm=tm, tk=tk)
        out = jax.block_until_ready(out)
        ref = _reference(x, weight, gamma, beta, size=size, stride=stride)

        pad = (size - 1) // 2
        Ho = (H + 2 * pad - size) // stride + 1
        Wo = (W + 2 * pad - size) // stride + 1
        assert out.shape == (N, Cout, Ho, Wo), (idx, out.shape)
        assert np.allclose(np.asarray(out), np.asarray(ref),
                           atol=1e-3, rtol=1e-3), f"mismatch in config {idx}"

    print("KERNEL_OK")
</pallas_src>

<mosaic_0001>
module attributes {stable_mosaic.version = 11 : i64} {
  func.func @_conv_stats_kernel(%arg0: i32, %arg1: i32, %arg2: memref<256x36xbf16, #tpu.memory_space<vmem>>, %arg3: memref<36x128xbf16, #tpu.memory_space<vmem>>, %arg4: memref<256x128xf32, #tpu.memory_space<vmem>>, %arg5: memref<1x2x128xf32, #tpu.memory_space<vmem>>) attributes {dimension_semantics = [#tpu.dimension_semantics<parallel>, #tpu.dimension_semantics<arbitrary>], iteration_bounds = array<i64: 2, 1>, scalar_prefetch = 0 : i64, scratch_operands = 0 : i64, tpu.core_type = #tpu.core_type<tc>, window_params = [{transform_indices = @transform_0, window_bounds = array<i64: 256, 36>}, {transform_indices = @transform_1, window_bounds = array<i64: 36, 128>}, {transform_indices = @transform_2, window_bounds = array<i64: 256, 128>}, {transform_indices = @transform_3, window_bounds = array<i64: 1, 2, 128>}]} {
    %c0 = arith.constant 0 : index
    %c0_0 = arith.constant 0 : index
    %0 = vector.load %arg2[%c0, %c0_0] : memref<256x36xbf16, #tpu.memory_space<vmem>>, vector<256x36xbf16>
    %c0_1 = arith.constant 0 : index
    %c0_2 = arith.constant 0 : index
    %1 = vector.load %arg3[%c0_1, %c0_2] : memref<36x128xbf16, #tpu.memory_space<vmem>>, vector<36x128xbf16>
    %cst = arith.constant dense<0.000000e+00> : vector<256x128xf32>
    %2 = tpu.matmul %0, %1, %cst {dimension_numbers = #tpu.dot_dimension_numbers<[1], [0], [0], [1], [0, 0, 1, 1], [], []>} : vector<256x36xbf16>, vector<36x128xbf16>, vector<256x128xf32> -> vector<256x128xf32>
    %c0_3 = arith.constant 0 : index
    %c0_4 = arith.constant 0 : index
    %3 = vector.load %arg4[%c0_3, %c0_4] : memref<256x128xf32, #tpu.memory_space<vmem>>, vector<256x128xf32>
    tpu.vector_store %arg4[%c0_3, %c0_4], %2 {strides = array<i32>} : memref<256x128xf32, #tpu.memory_space<vmem>>, vector<256x128xf32>,
    %cst_5 = arith.constant dense<0.000000e+00> : vector<128xf32>
    %4 = vector.multi_reduction <add>, %2, %cst_5 [0] : vector<256x128xf32> to vector<128xf32>
    %5 = vector.shape_cast %4 : vector<128xf32> to vector<1x128xf32>
    %6 = arith.mulf %2, %2 : vector<256x128xf32>
    %cst_6 = arith.constant dense<0.000000e+00> : vector<128xf32>
    %7 = vector.multi_reduction <add>, %6, %cst_6 [0] : vector<256x128xf32> to vector<128xf32>
    %8 = vector.shape_cast %7 : vector<128xf32> to vector<1x128xf32>
    %9 = tpu.concatenate %5, %8 in 0 : vector<1x128xf32>, vector<1x128xf32> -> vector<2x128xf32>
    %10 = vector.shape_cast %9 : vector<2x128xf32> to vector<1x2x128xf32>
    %c0_7 = arith.constant 0 : index
    %c0_8 = arith.constant 0 : index
    %c0_9 = arith.constant 0 : index
    %11 = vector.load %arg5[%c0_7, %c0_8, %c0_9] : memref<1x2x128xf32, #tpu.memory_space<vmem>>, vector<1x2x128xf32>
    tpu.vector_store %arg5[%c0_7, %c0_8, %c0_9], %10 {strides = array<i32>} : memref<1x2x128xf32, #tpu.memory_space<vmem>>, vector<1x2x128xf32>,
    return
  }
  func.func @transform_0(%arg0: i32, %arg1: i32) -> (i32, i32) {
    %c0_i32 = arith.constant 0 : i32
    return %arg0, %arg1 : i32, i32
  }
  func.func @transform_1(%arg0: i32, %arg1: i32) -> (i32, i32) {
    %c0_i32 = arith.constant 0 : i32
    %c0_i32_0 = arith.constant 0 : i32
    return %arg1, %c0_i32 : i32, i32
  }
  func.func @transform_2(%arg0: i32, %arg1: i32) -> (i32, i32) {
    %c0_i32 = arith.constant 0 : i32
    %c0_i32_0 = arith.constant 0 : i32
    return %arg0, %c0_i32 : i32, i32
  }
  func.func @transform_3(%arg0: i32, %arg1: i32) -> (i32, i32, i32) {
    %c0_i32 = arith.constant 0 : i32
    %c0_i32_0 = arith.constant 0 : i32
    %c0_i32_1 = arith.constant 0 : i32
    return %arg0, %c0_i32, %c0_i32_0 : i32, i32, i32
  }
}

module attributes {stable_mosaic.version = 11 : i64} {
  func.func @_bn_lrelu_kernel(%arg0: i32, %arg1: memref<256x128xf32, #tpu.memory_space<vmem>>, %arg2: memref<1x128xf32, #tpu.memory_space<vmem>>, %arg3: memref<1x128xf32, #tpu.memory_space<vmem>>, %arg4: memref<256x128xf32, #tpu.memory_space<vmem>>) attributes {dimension_semantics = [#tpu.dimension_semantics<parallel>], iteration_bounds = array<i64: 2>, scalar_prefetch = 0 : i64, scratch_operands = 0 : i64, tpu.core_type = #tpu.core_type<tc>, window_params = [{transform_indices = @transform_0, window_bounds = array<i64: 256, 128>}, {pipeline_mode = #tpu.pipeline_mode<synchronous>, transform_indices = @transform_1, window_bounds = array<i64: 1, 128>}, {pipeline_mode = #tpu.pipeline_mode<synchronous>, transform_indices = @transform_2, window_bounds = array<i64: 1, 128>}, {transform_indices = @transform_3, window_bounds = array<i64: 256, 128>}]} {
    %c0 = arith.constant 0 : index
    %c0_0 = arith.constant 0 : index
    %0 = vector.load %arg1[%c0, %c0_0] : memref<256x128xf32, #tpu.memory_space<vmem>>, vector<256x128xf32>
    %c0_1 = arith.constant 0 : index
    %c0_2 = arith.constant 0 : index
    %1 = vector.load %arg2[%c0_1, %c0_2] : memref<1x128xf32, #tpu.memory_space<vmem>>, vector<1x128xf32>
    %2 = vector.broadcast %1 : vector<1x128xf32> to vector<256x128xf32>
    %3 = arith.mulf %0, %2 : vector<256x128xf32>
    %c0_3 = arith.constant 0 : index
    %c0_4 = arith.constant 0 : index
    %4 = vector.load %arg3[%c0_3, %c0_4] : memref<1x128xf32, #tpu.memory_space<vmem>>, vector<1x128xf32>
    %5 = vector.broadcast %4 : vector<1x128xf32> to vector<256x128xf32>
    %6 = arith.addf %3, %5 : vector<256x128xf32>
    %cst = arith.constant 0.000000e+00 : f32
    %7 = vector.broadcast %cst : f32 to vector<256x128xf32>
    %8 = arith.cmpf oge, %6, %7 : vector<256x128xf32>
    %cst_5 = arith.constant 1.000000e-01 : f32
    %9 = vector.broadcast %cst_5 : f32 to vector<256x128xf32>
    %10 = arith.mulf %9, %6 : vector<256x128xf32>
    %11 = arith.select %8, %6, %10 : vector<256x128xi1>, vector<256x128xf32>
    %c0_6 = arith.constant 0 : index
    %c0_7 = arith.constant 0 : index
    %12 = vector.load %arg4[%c0_6, %c0_7] : memref<256x128xf32, #tpu.memory_space<vmem>>, vector<256x128xf32>
    tpu.vector_store %arg4[%c0_6, %c0_7], %11 {strides = array<i32>} : memref<256x128xf32, #tpu.memory_space<vmem>>, vector<256x128xf32>,
    return
  }
  func.func @transform_0(%arg0: i32) -> (i32, i32) {
    %c0_i32 = arith.constant 0 : i32
    %c0_i32_0 = arith.constant 0 : i32
    return %arg0, %c0_i32 : i32, i32
  }
  func.func @transform_1(%arg0: i32) -> (i32, i32) {
    %c0_i32 = arith.constant 0 : i32
    %c0_i32_0 = arith.constant 0 : i32
    %c0_i32_1 = arith.constant 0 : i32
    return %c0_i32, %c0_i32_0 : i32, i32
  }
  func.func @transform_2(%arg0: i32) -> (i32, i32) {
    %c0_i32 = arith.constant 0 : i32
    %c0_i32_0 = arith.constant 0 : i32
    %c0_i32_1 = arith.constant 0 : i32
    return %c0_i32, %c0_i32_0 : i32, i32
  }
  func.func @transform_3(%arg0: i32) -> (i32, i32) {
    %c0_i32 = arith.constant 0 : i32
    %c0_i32_0 = arith.constant 0 : i32
    return %arg0, %c0_i32 : i32, i32
  }
}

</mosaic_0001>

<llo_original>
// kernel: darknet_conv.3
$region0: #{darknet_conv.3}
  #allocation0 [shape = 'u32[]', space=smem, size = 0x4, offset = 0x4, fixed_abs, tag = 'smem constant byte address 0x4 - core index']
  #allocation1 [shape = 'u32[144,128]{1,0:T(1,128)}', space=vmem, size = 0x12000, scoped, tag = 'internal scratch']
  %s0 = inlined_call_operand.vmem [shape: f32[512,128], index: 0, kind: input, shape index: {}, may-alias: {0,3}]
  %s1 = inlined_call_operand.vmem [shape: f32[1,128], index: 1, kind: input, shape index: {}]
  %s2 = inlined_call_operand.vmem [shape: f32[1,128], index: 2, kind: input, shape index: {}]
  %s3 = inlined_call_operand.vmem [shape: f32[512,128], index: 3, kind: output, shape index: {}, may-alias: {0,3}]
  %s4 = sld [smem:[#allocation0]]
  $region45: #{darknet_conv.3} parent=0
    _
  %s6 = ssub.s32 1, %s4
  %s7 = scalar_select 0, %s6, %s4
  loop: start=0, step=1, limit=4
  $region2: #{darknet_conv.3} parent=0 // loop_pre_header
    _
  $region3: #{darknet_conv.3} parent=0 // loop_header
    %s9 = sphi 0, %s13
    %p10 = scmp.ge.s32.totalorder %s9, 4
    %s19 = sphi 0, %s21
    %s22 = sphi 0, %s19
    %s23 = sphi 0, %s22
    %s39 = sphi 0, %s23
    %s43 = sphi 0, %s43
    %s45 = sphi 0, %s43
    %s46 = sphi 0, %s45
    %s60 = sphi 0, %s46
    %s64 = sphi 0, %s64
    %s66 = sphi 0, %s64
    %s67 = sphi 0, %s66
    %s81 = sphi 0, %s67
    %s87 = sphi 0, %s89
    %s90 = sphi 0, %s87
    %s91 = sphi 0, %s90
    %s107 = sphi 0, %s91
  $region4: #{darknet_conv.3} parent=0 // loop_header_branch
    %12 = sbr.rel (%p10) target = $region8
  $region5: #{darknet_conv.3} parent=0 // loop_body
    %s14 = ssub.s32 %s9, 1
    %s15 = ssub.s32 %s9, 2
    %s16 = sadd.s32 %s9, 1
    %s17 = ssub.s32 %s9, %s16
    %p18 = scmp.eq.s32.totalorder %s17, 0
    %s20 = sadd.s32 %s19, 1
    %s21 = scalar_select %p18, %s19, %s20
    %p24 = pneg %p18
    %p25 = scmp.eq.s32.totalorder %s9, 1
    %p26 = por %p24, %p25
    %p27 = scmp.ne.s32.totalorder %s19, %s22
    %p28 = scmp.eq.s32.totalorder %s9, 0
    %p29 = por %p27, %p28
    %p30 = scmp.ne.s32.totalorder %s19, %s22
    %p31 = scmp.eq.s32.totalorder %s14, 1
    %p32 = por %p30, %p31
    %p33 = scmp.ne.s32.totalorder %s22, %s23
    %p34 = scmp.eq.s32.totalorder %s14, 0
    %p35 = por %p33, %p34
    %p36 = scmp.ne.s32.totalorder %s22, %s23
    %p37 = scmp.eq.s32.totalorder %s15, 1
    %p38 = por %p36, %p37
    %p40 = scmp.ne.s32.totalorder %s23, %s39
    %p41 = scmp.eq.s32.totalorder %s15, 0
    %p42 = por %p40, %p41
    %s44 = sadd.s32 %s43, 1
    %p47 = scmp.eq.s32.totalorder %s9, 1
    %p48 = scmp.ne.s32.totalorder %s43, %s45
    %p49 = scmp.eq.s32.totalorder %s9, 0
    %p50 = por %p48, %p49
    %p51 = scmp.ne.s32.totalorder %s43, %s45
    %p52 = scmp.eq.s32.totalorder %s14, 1
    %p53 = por %p51, %p52
    %p54 = scmp.ne.s32.totalorder %s45, %s46
    %p55 = scmp.eq.s32.totalorder %s14, 0
    %p56 = por %p54, %p55
    %p57 = scmp.ne.s32.totalorder %s45, %s46
    %p58 = scmp.eq.s32.totalorder %s15, 1
    %p59 = por %p57, %p58
    %p61 = scmp.ne.s32.totalorder %s46, %s60
    %p62 = scmp.eq.s32.totalorder %s15, 0
    %p63 = por %p61, %p62
    %s65 = sadd.s32 %s64, 1
    %p68 = scmp.eq.s32.totalorder %s9, 1
    %p69 = scmp.ne.s32.totalorder %s64, %s66
    %p70 = scmp.eq.s32.totalorder %s9, 0
    %p71 = por %p69, %p70
    %p72 = scmp.ne.s32.totalorder %s64, %s66
    %p73 = scmp.eq.s32.totalorder %s14, 1
    %p74 = por %p72, %p73
    %p75 = scmp.ne.s32.totalorder %s66, %s67
    %p76 = scmp.eq.s32.totalorder %s14, 0
    %p77 = por %p75, %p76
    %p78 = scmp.ne.s32.totalorder %s66, %s67
    %p79 = scmp.eq.s32.totalorder %s15, 1
    %p80 = por %p78, %p79
    %p82 = scmp.ne.s32.totalorder %s67, %s81
    %p83 = scmp.eq.s32.totalorder %s15, 0
    %p84 = por %p82, %p83
    %s85 = ssub.s32 %s9, %s16
    %p86 = scmp.eq.s32.totalorder %s85, 0
    %s88 = sadd.s32 %s87, 1
    %s89 = scalar_select %p86, %s87, %s88
    %p92 = pneg %p86
    %p93 = scmp.eq.s32.totalorder %s9, 1
    %p94 = por %p92, %p93
    %p95 = scmp.ne.s32.totalorder %s87, %s90
    %p96 = scmp.eq.s32.totalorder %s9, 0
    %p97 = por %p95, %p96
    %p98 = scmp.ne.s32.totalorder %s87, %s90
    %p99 = scmp.eq.s32.totalorder %s14, 1
    %p100 = por %p98, %p99
    %p101 = scmp.ne.s32.totalorder %s90, %s91
    %p102 = scmp.eq.s32.totalorder %s14, 0
    %p103 = por %p101, %p102
    %p104 = scmp.ne.s32.totalorder %s90, %s91
    %p105 = scmp.eq.s32.totalorder %s15, 1
    %p106 = por %p104, %p105
    %p108 = scmp.ne.s32.totalorder %s91, %s107
    %p109 = scmp.eq.s32.totalorder %s15, 0
    %p110 = por %p108, %p109
    %p111 = scmp.le.s32.totalorder 1, %s9
    %p112 = scmp.lt.s32.totalorder %s9, 3
    %p113 = pnand %p111, %p112
    %p114 = pneg %p113
    // Predicated region
    $region9: #{darknet_conv.3} parent=5 // pred_check
      _
    $region10: #{darknet_conv.3} parent=5 // pred_check_branch
      %116 = sbr.rel (%p113) target = $region12
    $region11: #{darknet_conv.3} parent=5 // pred_region
      %s117 = ssub.s32 %s9, 1
      // Predicated region
      $region13: #{darknet_conv.3} parent=11 // pred_check
        %p118 = pneg %p56
      $region14: #{darknet_conv.3} parent=11 // pred_check_branch
        %120 = sbr.rel (%p118) target = $region16
      $region15: #{darknet_conv.3} parent=11 // pred_region
        _
      $region16: #{darknet_conv.3} parent=11 // pred_fallthru
        _
      // Predicated region
      $region17: #{darknet_conv.3} parent=11 // pred_check
        %p121 = pneg %p77
      $region18: #{darknet_conv.3} parent=11 // pred_check_branch
        %123 = sbr.rel (%p121) target = $region20
      $region19: #{darknet_conv.3} parent=11 // pred_region
        _
      $region20: #{darknet_conv.3} parent=11 // pred_fallthru
        _
    $region12: #{darknet_conv.3} parent=5 // pred_fallthru
      _
    %p124 = scmp.lt.s32.totalorder %s9, 2
    // Predicated region
    $region21: #{darknet_conv.3} parent=5 // pred_check
      %p125 = pneg %p124
    $region22: #{darknet_conv.3} parent=5 // pred_check_branch
      %127 = sbr.rel (%p125) target = $region24
    $region23: #{darknet_conv.3} parent=5 // pred_region
      // Predicated region
      $region25: #{darknet_conv.3} parent=23 // pred_check
        %p128 = pneg %p29
      $region26: #{darknet_conv.3} parent=23 // pred_check_branch
        %130 = sbr.rel (%p128) target = $region28
      $region27: #{darknet_conv.3} parent=23 // pred_region
        %s131 = smul.u32 32, %s9
        %p132 = scmp.lt.s32.totalorder %s131, 63
        %s133 = scalar_select %p132, %s131, 63
        %s134 = smul.addr %s133, 8
        %s135 = scalar_lea.vmem %s0, %s134
        %s136 = smul.u32 32, %s9
      $region28: #{darknet_conv.3} parent=23 // pred_fallthru
        _
    $region24: #{darknet_conv.3} parent=5 // pred_fallthru
      _
    %p137 = scmp.le.s32.totalorder 1, %s9
    %p138 = scmp.lt.s32.totalorder %s9, 3
    %p139 = pnand %p137, %p138
    %p140 = pneg %p139
    // Predicated region
    $region29: #{darknet_conv.3} parent=5 // pred_check
      _
    $region30: #{darknet_conv.3} parent=5 // pred_check_branch
      %142 = sbr.rel (%p139) target = $region32
    $region31: #{darknet_conv.3} parent=5 // pred_region
      %s143 = ssub.s32 %s9, 1
      %s144 = smul.u32 32, %s14
      %p145 = scmp.lt.s32.totalorder %s144, 63
      %s146 = scalar_select %p145, %s144, 63
      %s147 = smul.addr %s146, 8
      %s148 = scalar_lea.vmem %s0, %s147
      %p149 = pneg %p35
      %p150 = pneg %p32
      %p151 = pneg %p56
      %p152 = pneg %p53
      %p153 = pneg %p77
      %p154 = pneg %p74
      %p155 = pneg %p103
      %p156 = pneg %p100
      %s157 = smul.u32 32, %s14
      %p158 = scmp.lt.s32.totalorder %s157, 63
      %s159 = scalar_select %p158, %s157, 63
      %s160 = smul.addr %s159, 8
      %s161 = scalar_lea.vmem %s3, %s160
      %s162 = smul.u32 32, %s14
      %p163 = scmp.lt.s32.totalorder %s162, 63
      %s164 = scalar_select %p163, %s162, 63
      %s165 = smul.addr %s164, 8
      %s166 = scalar_lea.vmem %s0, %s165
      %s167 = smul.u32 32, %s14
      %s168 = smul.u32 32, %s14
      %p169 = scmp.lt.s32.totalorder %s168, 63
      %s170 = scalar_select %p169, %s168, 63
      %s171 = smul.addr %s170, 8
      %s172 = scalar_lea.vmem %s3, %s171
      %s173 = smul.u32 32, %s14
      %v174 = vld [vmem:[%s166] sm:$0xff]
      %v175 = vld [vmem:[%s166 + $0x8] sm:$0xff]
      %v176 = vld [vmem:[%s166 + $0x10] sm:$0xff]
      %v177 = vld [vmem:[%s166 + $0x18] sm:$0xff]
      %v178 = vld [vmem:[%s166 + $0x20] sm:$0xff]
      %v179 = vld [vmem:[%s166 + $0x28] sm:$0xff]
      %v180 = vld [vmem:[%s166 + $0x30] sm:$0xff]
      %v181 = vld [vmem:[%s166 + $0x38] sm:$0xff]
      %v182 = vld [vmem:[%s166 + $0x40] sm:$0xff]
      %v183 = vld [vmem:[%s166 + $0x48] sm:$0xff]
      %v184 = vld [vmem:[%s166 + $0x50] sm:$0xff]
      %v185 = vld [vmem:[%s166 + $0x58] sm:$0xff]
      %v186 = vld [vmem:[%s166 + $0x60] sm:$0xff]
      %v187 = vld [vmem:[%s166 + $0x68] sm:$0xff]
      %v188 = vld [vmem:[%s166 + $0x70] sm:$0xff]
      %v189 = vld [vmem:[%s166 + $0x78] sm:$0xff]
      %v190 = vld [vmem:[%s166 + $0x80] sm:$0xff]
      %v191 = vld [vmem:[%s166 + $0x88] sm:$0xff]
      %v192 = vld [vmem:[%s166 + $0x90] sm:$0xff]
      %v193 = vld [vmem:[%s166 + $0x98] sm:$0xff]
      %v194 = vld [vmem:[%s166 + $0xa0] sm:$0xff]
      %v195 = vld [vmem:[%s166 + $0xa8] sm:$0xff]
      %v196 = vld [vmem:[%s166 + $0xb0] sm:$0xff]
      %v197 = vld [vmem:[%s166 + $0xb8] sm:$0xff]
      %v198 = vld [vmem:[%s166 + $0xc0] sm:$0xff]
      %v199 = vld [vmem:[%s166 + $0xc8] sm:$0xff]
      %v200 = vld [vmem:[%s166 + $0xd0] sm:$0xff]
      %v201 = vld [vmem:[%s166 + $0xd8] sm:$0xff]
      %v202 = vld [vmem:[%s166 + $0xe0] sm:$0xff]
      %v203 = vld [vmem:[%s166 + $0xe8] sm:$0xff]
      %v204 = vld [vmem:[%s166 + $0xf0] sm:$0xff]
      %v205 = vld [vmem:[%s166 + $0xf8] sm:$0xff]
      %v206 = vld [vmem:[%s1] sm:$0x1]
      %v208 = vlaneseq
      %v209 = vshrl.u32 %v208, 7
      %v210 = vsub.s32 0, %v209
      %v211 = vrot.slane %v206, %v210
      %v213 = vmul.f32 %v174, %v211
      %v214 = vmul.f32 %v175, %v211
      %v215 = vmul.f32 %v176, %v211
      %v216 = vmul.f32 %v177, %v211
      %v217 = vmul.f32 %v178, %v211
      %v218 = vmul.f32 %v179, %v211
      %v219 = vmul.f32 %v180, %v211
      %v220 = vmul.f32 %v181, %v211
      %v221 = vmul.f32 %v182, %v211
      %v222 = vmul.f32 %v183, %v211
      %v223 = vmul.f32 %v184, %v211
      %v224 = vmul.f32 %v185, %v211
      %v225 = vmul.f32 %v186, %v211
      %v226 = vmul.f32 %v187, %v211
      %v227 = vmul.f32 %v188, %v211
      %v228 = vmul.f32 %v189, %v211
      %v229 = vmul.f32 %v190, %v211
      %v230 = vmul.f32 %v191, %v211
      %v231 = vmul.f32 %v192, %v211
      %v232 = vmul.f32 %v193, %v211
      %v233 = vmul.f32 %v194, %v211
      %v234 = vmul.f32 %v195, %v211
      %v235 = vmul.f32 %v196, %v211
      %v236 = vmul.f32 %v197, %v211
      %v237 = vmul.f32 %v198, %v211
      %v238 = vmul.f32 %v199, %v211
      %v239 = vmul.f32 %v200, %v211
      %v240 = vmul.f32 %v201, %v211
      %v241 = vmul.f32 %v202, %v211
      %v242 = vmul.f32 %v203, %v211
      %v243 = vmul.f32 %v204, %v211
      %v244 = vmul.f32 %v205, %v211
      %v245 = vld [vmem:[%s2] sm:$0x1]
      %v247 = vlaneseq
      %v248 = vshrl.u32 %v247, 7
      %v249 = vsub.s32 0, %v248
      %v250 = vrot.slane %v245, %v249
      %v252 = vadd.f32 %v213, %v250
      %v253 = vadd.f32 %v214, %v250
      %v254 = vadd.f32 %v215, %v250
      %v255 = vadd.f32 %v216, %v250
      %v256 = vadd.f32 %v217, %v250
      %v257 = vadd.f32 %v218, %v250
      %v258 = vadd.f32 %v219, %v250
      %v259 = vadd.f32 %v220, %v250
      %v260 = vadd.f32 %v221, %v250
      %v261 = vadd.f32 %v222, %v250
      %v262 = vadd.f32 %v223, %v250
      %v263 = vadd.f32 %v224, %v250
      %v264 = vadd.f32 %v225, %v250
      %v265 = vadd.f32 %v226, %v250
      %v266 = vadd.f32 %v227, %v250
      %v267 = vadd.f32 %v228, %v250
      %v268 = vadd.f32 %v229, %v250
      %v269 = vadd.f32 %v230, %v250
      %v270 = vadd.f32 %v231, %v250
      %v271 = vadd.f32 %v232, %v250
      %v272 = vadd.f32 %v233, %v250
      %v273 = vadd.f32 %v234, %v250
      %v274 = vadd.f32 %v235, %v250
      %v275 = vadd.f32 %v236, %v250
      %v276 = vadd.f32 %v237, %v250
      %v277 = vadd.f32 %v238, %v250
      %v278 = vadd.f32 %v239, %v250
      %v279 = vadd.f32 %v240, %v250
      %v280 = vadd.f32 %v241, %v250
      %v281 = vadd.f32 %v242, %v250
      %v282 = vadd.f32 %v243, %v250
      %v283 = vadd.f32 %v244, %v250
      %vm284 = vcmp.ge.f32.partialorder %v252, 0.0
      %vm285 = vcmp.ge.f32.partialorder %v253, 0.0
      %vm286 = vcmp.ge.f32.partialorder %v254, 0.0
      %vm287 = vcmp.ge.f32.partialorder %v255, 0.0
      %vm288 = vcmp.ge.f32.partialorder %v256, 0.0
      %vm289 = vcmp.ge.f32.partialorder %v257, 0.0
      %vm290 = vcmp.ge.f32.partialorder %v258, 0.0
      %vm291 = vcmp.ge.f32.partialorder %v259, 0.0
      %vm292 = vcmp.ge.f32.partialorder %v260, 0.0
      %vm293 = vcmp.ge.f32.partialorder %v261, 0.0
      %vm294 = vcmp.ge.f32.partialorder %v262, 0.0
      %vm295 = vcmp.ge.f32.partialorder %v263, 0.0
      %vm296 = vcmp.ge.f32.partialorder %v264, 0.0
      %vm297 = vcmp.ge.f32.partialorder %v265, 0.0
      %vm298 = vcmp.ge.f32.partialorder %v266, 0.0
      %vm299 = vcmp.ge.f32.partialorder %v267, 0.0
      %vm300 = vcmp.ge.f32.partialorder %v268, 0.0
      %vm301 = vcmp.ge.f32.partialorder %v269, 0.0
      %vm302 = vcmp.ge.f32.partialorder %v270, 0.0
      %vm303 = vcmp.ge.f32.partialorder %v271, 0.0
      %vm304 = vcmp.ge.f32.partialorder %v272, 0.0
      %vm305 = vcmp.ge.f32.partialorder %v273, 0.0
      %vm306 = vcmp.ge.f32.partialorder %v274, 0.0
      %vm307 = vcmp.ge.f32.partialorder %v275, 0.0
      %vm308 = vcmp.ge.f32.partialorder %v276, 0.0
      %vm309 = vcmp.ge.f32.partialorder %v277, 0.0
      %vm310 = vcmp.ge.f32.partialorder %v278, 0.0
      %vm311 = vcmp.ge.f32.partialorder %v279, 0.0
      %vm312 = vcmp.ge.f32.partialorder %v280, 0.0
      %vm313 = vcmp.ge.f32.partialorder %v281, 0.0
      %vm314 = vcmp.ge.f32.partialorder %v282, 0.0
      %vm315 = vcmp.ge.f32.partialorder %v283, 0.0
      %v316 = vmul.f32 %v252, 0.1
      %v317 = vmul.f32 %v253, 0.1
      %v318 = vmul.f32 %v254, 0.1
      %v319 = vmul.f32 %v255, 0.1
      %v320 = vmul.f32 %v256, 0.1
      %v321 = vmul.f32 %v257, 0.1
      %v322 = vmul.f32 %v258, 0.1
      %v323 = vmul.f32 %v259, 0.1
      %v324 = vmul.f32 %v260, 0.1
      %v325 = vmul.f32 %v261, 0.1
      %v326 = vmul.f32 %v262, 0.1
      %v327 = vmul.f32 %v263, 0.1
      %v328 = vmul.f32 %v264, 0.1
      %v329 = vmul.f32 %v265, 0.1
      %v330 = vmul.f32 %v266, 0.1
      %v331 = vmul.f32 %v267, 0.1
      %v332 = vmul.f32 %v268, 0.1
      %v333 = vmul.f32 %v269, 0.1
      %v334 = vmul.f32 %v270, 0.1
      %v335 = vmul.f32 %v271, 0.1
      %v336 = vmul.f32 %v272, 0.1
      %v337 = vmul.f32 %v273, 0.1
      %v338 = vmul.f32 %v274, 0.1
      %v339 = vmul.f32 %v275, 0.1
      %v340 = vmul.f32 %v276, 0.1
      %v341 = vmul.f32 %v277, 0.1
      %v342 = vmul.f32 %v278, 0.1
      %v343 = vmul.f32 %v279, 0.1
      %v344 = vmul.f32 %v280, 0.1
      %v345 = vmul.f32 %v281, 0.1
      %v346 = vmul.f32 %v282, 0.1
      %v347 = vmul.f32 %v283, 0.1
      %v348 = vsel %vm284, %v252, %v316
      %v349 = vsel %vm285, %v253, %v317
      %v350 = vsel %vm286, %v254, %v318
      %v351 = vsel %vm287, %v255, %v319
      %v352 = vsel %vm288, %v256, %v320
      %v353 = vsel %vm289, %v257, %v321
      %v354 = vsel %vm290, %v258, %v322
      %v355 = vsel %vm291, %v259, %v323
      %v356 = vsel %vm292, %v260, %v324
      %v357 = vsel %vm293, %v261, %v325
      %v358 = vsel %vm294, %v262, %v326
      %v359 = vsel %vm295, %v263, %v327
      %v360 = vsel %vm296, %v264, %v328
      %v361 = vsel %vm297, %v265, %v329
      %v362 = vsel %vm298, %v266, %v330
      %v363 = vsel %vm299, %v267, %v331
      %v364 = vsel %vm300, %v268, %v332
      %v365 = vsel %vm301, %v269, %v333
      %v366 = vsel %vm302, %v270, %v334
      %v367 = vsel %vm303, %v271, %v335
      %v368 = vsel %vm304, %v272, %v336
      %v369 = vsel %vm305, %v273, %v337
      %v370 = vsel %vm306, %v274, %v338
      %v371 = vsel %vm307, %v275, %v339
      %v372 = vsel %vm308, %v276, %v340
      %v373 = vsel %vm309, %v277, %v341
      %v374 = vsel %vm310, %v278, %v342
      %v375 = vsel %vm311, %v279, %v343
      %v376 = vsel %vm312, %v280, %v344
      %v377 = vsel %vm313, %v281, %v345
      %v378 = vsel %vm314, %v282, %v346
      %v379 = vsel %vm315, %v283, %v347
      %380 = vst [vmem:[%s172] sm:$0xff] %v348
      %381 = vst [vmem:[%s172 + $0x8] sm:$0xff] %v349
      %382 = vst [vmem:[%s172 + $0x10] sm:$0xff] %v350
      %383 = vst [vmem:[%s172 + $0x18] sm:$0xff] %v351
      %384 = vst [vmem:[%s172 + $0x20] sm:$0xff] %v352
      %385 = vst [vmem:[%s172 + $0x28] sm:$0xff] %v353
      %386 = vst [vmem:[%s172 + $0x30] sm:$0xff] %v354
      %387 = vst [vmem:[%s172 + $0x38] sm:$0xff] %v355
      %388 = vst [vmem:[%s172 + $0x40] sm:$0xff] %v356
      %389 = vst [vmem:[%s172 + $0x48] sm:$0xff] %v357
      %390 = vst [vmem:[%s172 + $0x50] sm:$0xff] %v358
      %391 = vst [vmem:[%s172 + $0x58] sm:$0xff] %v359
      %392 = vst [vmem:[%s172 + $0x60] sm:$0xff] %v360
      %393 = vst [vmem:[%s172 + $0x68] sm:$0xff] %v361
      %394 = vst [vmem:[%s172 + $0x70] sm:$0xff] %v362
      %395 = vst [vmem:[%s172 + $0x78] sm:$0xff] %v363
      %396 = vst [vmem:[%s172 + $0x80] sm:$0xff] %v364
      %397 = vst [vmem:[%s172 + $0x88] sm:$0xff] %v365
      %398 = vst [vmem:[%s172 + $0x90] sm:$0xff] %v366
      %399 = vst [vmem:[%s172 + $0x98] sm:$0xff] %v367
      %400 = vst [vmem:[%s172 + $0xa0] sm:$0xff] %v368
      %401 = vst [vmem:[%s172 + $0xa8] sm:$0xff] %v369
      %402 = vst [vmem:[%s172 + $0xb0] sm:$0xff] %v370
      %403 = vst [vmem:[%s172 + $0xb8] sm:$0xff] %v371
      %404 = vst [vmem:[%s172 + $0xc0] sm:$0xff] %v372
      %405 = vst [vmem:[%s172 + $0xc8] sm:$0xff] %v373
      %406 = vst [vmem:[%s172 + $0xd0] sm:$0xff] %v374
      %407 = vst [vmem:[%s172 + $0xd8] sm:$0xff] %v375
      %408 = vst [vmem:[%s172 + $0xe0] sm:$0xff] %v376
      %409 = vst [vmem:[%s172 + $0xe8] sm:$0xff] %v377
      %410 = vst [vmem:[%s172 + $0xf0] sm:$0xff] %v378
      %411 = vst [vmem:[%s172 + $0xf8] sm:$0xff] %v379
      %s412 = smul.u32 32, %s14
      %p413 = scmp.lt.s32.totalorder %s412, 63
      %s414 = scalar_select %p413, %s412, 63
      %s415 = smul.addr %s414, 8
      %s416 = scalar_lea.vmem %s3, %s415
      // Predicated region
      $region33: #{darknet_conv.3} parent=31 // pred_check
        %p417 = pneg %p100
      $region34: #{darknet_conv.3} parent=31 // pred_check_branch
        %419 = sbr.rel (%p417) target = $region36
      $region35: #{darknet_conv.3} parent=31 // pred_region
        %s420 = smul.u32 32, %s14
      $region36: #{darknet_conv.3} parent=31 // pred_fallthru
        _
    $region32: #{darknet_conv.3} parent=5 // pred_fallthru
      _
    %p421 = scmp.le.s32.totalorder 2, %s9
    // Predicated region
    $region37: #{darknet_conv.3} parent=5 // pred_check
      %p422 = pneg %p421
    $region38: #{darknet_conv.3} parent=5 // pred_check_branch
      %424 = sbr.rel (%p422) target = $region40
    $region39: #{darknet_conv.3} parent=5 // pred_region
      %s425 = ssub.s32 %s9, 2
      // Predicated region
      $region41: #{darknet_conv.3} parent=39 // pred_check
        %p426 = pneg %p106
      $region42: #{darknet_conv.3} parent=39 // pred_check_branch
        %428 = sbr.rel (%p426) target = $region44
      $region43: #{darknet_conv.3} parent=39 // pred_region
        %s429 = smul.u32 32, %s15
        %p430 = scmp.lt.s32.totalorder %s429, 63
        %s431 = scalar_select %p430, %s429, 63
        %s432 = smul.addr %s431, 8
        %s433 = scalar_lea.vmem %s3, %s432
      $region44: #{darknet_conv.3} parent=39 // pred_fallthru
        _
    $region40: #{darknet_conv.3} parent=5 // pred_fallthru
      _
  $region6: #{darknet_conv.3} parent=0 // loop_footer
    %s13 = sadd.s32 1, %s9
  $region7: #{darknet_conv.3} parent=0 // loop_footer_branch
    %8 = sbr.rel target = $region3
  $region8: #{darknet_conv.3} parent=0 // loop_exit
    _

// kernel: darknet_conv.2
$region0: #{darknet_conv.2}
  #allocation0 [shape = 'u32[]', space=smem, size = 0x4, offset = 0x4, fixed_abs, tag = 'smem constant byte address 0x4 - core index']
  #allocation1 [shape = 'u32[144,128]{1,0:T(1,128)}', space=vmem, size = 0x12000, scoped, tag = 'internal scratch']
  %s0 = inlined_call_operand.vmem [shape: bf16[512,36], index: 0, kind: input, shape index: {}]
  %s1 = inlined_call_operand.vmem [shape: bf16[36,128], index: 1, kind: input, shape index: {}]
  %s2 = inlined_call_operand.vmem [shape: f32[512,128], index: 2, kind: output, shape index: {0}]
  %s3 = inlined_call_operand.vmem [shape: f32[2,2,128], index: 3, kind: output, shape index: {1}]
  %4 = xla_tuple %s2, %s3
  %s5 = sld [smem:[#allocation0]]
  $region49: #{darknet_conv.2} parent=0
    _
  %s7 = ssub.s32 1, %s5
  %s8 = scalar_select 0, %s7, %s5
  loop: start=0, step=1, limit=4
  $region2: #{darknet_conv.2} parent=0 // loop_pre_header
    _
  $region3: #{darknet_conv.2} parent=0 // loop_header
    %s10 = sphi 0, %s14
    %p11 = scmp.ge.s32.totalorder %s10, 4
    %s17 = sphi 0, %s29
    %s18 = sphi 0, %s25
    %s19 = sphi 0, %s17
    %s20 = sphi 0, %s18
    %s21 = sphi 0, %s19
    %s22 = sphi 0, %s20
    %s34 = sphi 0, %s36
    %s37 = sphi 0, %s34
    %s38 = sphi 0, %s37
    %s54 = sphi 0, %s38
    %s60 = sphi 0, %s62
    %s63 = sphi 0, %s60
    %s64 = sphi 0, %s63
    %s80 = sphi 0, %s64
    %s86 = sphi 0, %s88
    %s89 = sphi 0, %s86
    %s90 = sphi 0, %s89
    %s106 = sphi 0, %s90
    %s112 = sphi 0, %s114
    %s115 = sphi 0, %s112
    %s116 = sphi 0, %s115
    %s132 = sphi 0, %s116
  $region4: #{darknet_conv.2} parent=0 // loop_header_branch
    %13 = sbr.rel (%p11) target = $region8
  $region5: #{darknet_conv.2} parent=0 // loop_body
    %s15 = ssub.s32 %s10, 1
    %s16 = ssub.s32 %s10, 2
    %s23 = sadd.s32 1, %s18
    %p24 = scmp.ge.s32.totalorder %s23, 1
    %s25 = scalar_select %p24, 0, %s23
    %s26 = sadd.s32 1, %s17
    %s27 = scalar_select %p24, %s26, %s17
    %p28 = scmp.ge.s32.totalorder %s27, 2
    %s29 = scalar_select %p28, 0, %s27
    %s30 = ssub.s32 %s17, %s29
    %s31 = ssub.s32 %s18, %s25
    %s32 = sor.u32 %s30, %s31
    %p33 = scmp.eq.s32.totalorder %s32, 0
    %s35 = sadd.s32 %s34, 1
    %s36 = scalar_select %p33, %s34, %s35
    %p39 = pneg %p33
    %p40 = scmp.eq.s32.totalorder %s10, 1
    %p41 = por %p39, %p40
    %p42 = scmp.ne.s32.totalorder %s34, %s37
    %p43 = scmp.eq.s32.totalorder %s10, 0
    %p44 = por %p42, %p43
    %p45 = scmp.ne.s32.totalorder %s34, %s37
    %p46 = scmp.eq.s32.totalorder %s15, 1
    %p47 = por %p45, %p46
    %p48 = scmp.ne.s32.totalorder %s37, %s38
    %p49 = scmp.eq.s32.totalorder %s15, 0
    %p50 = por %p48, %p49
    %p51 = scmp.ne.s32.totalorder %s37, %s38
    %p52 = scmp.eq.s32.totalorder %s16, 1
    %p53 = por %p51, %p52
    %p55 = scmp.ne.s32.totalorder %s38, %s54
    %p56 = scmp.eq.s32.totalorder %s16, 0
    %p57 = por %p55, %p56
    %s58 = ssub.s32 %s18, %s25
    %p59 = scmp.eq.s32.totalorder %s58, 0
    %s61 = sadd.s32 %s60, 1
    %s62 = scalar_select %p59, %s60, %s61
    %p65 = pneg %p59
    %p66 = scmp.eq.s32.totalorder %s10, 1
    %p67 = por %p65, %p66
    %p68 = scmp.ne.s32.totalorder %s60, %s63
    %p69 = scmp.eq.s32.totalorder %s10, 0
    %p70 = por %p68, %p69
    %p71 = scmp.ne.s32.totalorder %s60, %s63
    %p72 = scmp.eq.s32.totalorder %s15, 1
    %p73 = por %p71, %p72
    %p74 = scmp.ne.s32.totalorder %s63, %s64
    %p75 = scmp.eq.s32.totalorder %s15, 0
    %p76 = por %p74, %p75
    %p77 = scmp.ne.s32.totalorder %s63, %s64
    %p78 = scmp.eq.s32.totalorder %s16, 1
    %p79 = por %p77, %p78
    %p81 = scmp.ne.s32.totalorder %s64, %s80
    %p82 = scmp.eq.s32.totalorder %s16, 0
    %p83 = por %p81, %p82
    %s84 = ssub.s32 %s17, %s29
    %p85 = scmp.eq.s32.totalorder %s84, 0
    %s87 = sadd.s32 %s86, 1
    %s88 = scalar_select %p85, %s86, %s87
    %p91 = pneg %p85
    %p92 = scmp.eq.s32.totalorder %s10, 1
    %p93 = por %p91, %p92
    %p94 = scmp.ne.s32.totalorder %s86, %s89
    %p95 = scmp.eq.s32.totalorder %s10, 0
    %p96 = por %p94, %p95
    %p97 = scmp.ne.s32.totalorder %s86, %s89
    %p98 = scmp.eq.s32.totalorder %s15, 1
    %p99 = por %p97, %p98
    %p100 = scmp.ne.s32.totalorder %s89, %s90
    %p101 = scmp.eq.s32.totalorder %s15, 0
    %p102 = por %p100, %p101
    %p103 = scmp.ne.s32.totalorder %s89, %s90
    %p104 = scmp.eq.s32.totalorder %s16, 1
    %p105 = por %p103, %p104
    %p107 = scmp.ne.s32.totalorder %s90, %s106
    %p108 = scmp.eq.s32.totalorder %s16, 0
    %p109 = por %p107, %p108
    %s110 = ssub.s32 %s17, %s29
    %p111 = scmp.eq.s32.totalorder %s110, 0
    %s113 = sadd.s32 %s112, 1
    %s114 = scalar_select %p111, %s112, %s113
    %p117 = pneg %p111
    %p118 = scmp.eq.s32.totalorder %s10, 1
    %p119 = por %p117, %p118
    %p120 = scmp.ne.s32.totalorder %s112, %s115
    %p121 = scmp.eq.s32.totalorder %s10, 0
    %p122 = por %p120, %p121
    %p123 = scmp.ne.s32.totalorder %s112, %s115
    %p124 = scmp.eq.s32.totalorder %s15, 1
    %p125 = por %p123, %p124
    %p126 = scmp.ne.s32.totalorder %s115, %s116
    %p127 = scmp.eq.s32.totalorder %s15, 0
    %p128 = por %p126, %p127
    %p129 = scmp.ne.s32.totalorder %s115, %s116
    %p130 = scmp.eq.s32.totalorder %s16, 1
    %p131 = por %p129, %p130
    %p133 = scmp.ne.s32.totalorder %s116, %s132
    %p134 = scmp.eq.s32.totalorder %s16, 0
    %p135 = por %p133, %p134
    %p136 = scmp.le.s32.totalorder 1, %s10
    %p137 = scmp.lt.s32.totalorder %s10, 3
    %p138 = pnand %p136, %p137
    %p139 = pneg %p138
    // Predicated region
    $region9: #{darknet_conv.2} parent=5 // pred_check
      _
    $region10: #{darknet_conv.2} parent=5 // pred_check_branch
      %141 = sbr.rel (%p138) target = $region12
    $region11: #{darknet_conv.2} parent=5 // pred_region
      %s142 = ssub.s32 %s10, 1
      // Predicated region
      $region13: #{darknet_conv.2} parent=11 // pred_check
        %p143 = pneg %p76
      $region14: #{darknet_conv.2} parent=11 // pred_check_branch
        %145 = sbr.rel (%p143) target = $region16
      $region15: #{darknet_conv.2} parent=11 // pred_region
        %s146 = smul.u32 5, %s20
        %p147 = scmp.lt.s32.totalorder %s146, 4
        %s148 = scalar_select %p147, %s146, 4
        %s149 = smul.addr %s148, 4
        %s150 = scalar_lea.vmem %s1, %s149
        %s151 = smul.u32 5, %s20
      $region16: #{darknet_conv.2} parent=11 // pred_fallthru
        _
    $region12: #{darknet_conv.2} parent=5 // pred_fallthru
      _
    %p152 = scmp.lt.s32.totalorder %s10, 2
    // Predicated region
    $region17: #{darknet_conv.2} parent=5 // pred_check
      %p153 = pneg %p152
    $region18: #{darknet_conv.2} parent=5 // pred_check_branch
      %155 = sbr.rel (%p153) target = $region20
    $region19: #{darknet_conv.2} parent=5 // pred_region
      // Predicated region
      $region21: #{darknet_conv.2} parent=19 // pred_check
        %p156 = pneg %p44
      $region22: #{darknet_conv.2} parent=19 // pred_check_branch
        %158 = sbr.rel (%p156) target = $region24
      $region23: #{darknet_conv.2} parent=19 // pred_region
        %s159 = smul.u32 32, %s17
        %p160 = scmp.lt.s32.totalorder %s159, 63
        %s161 = scalar_select %p160, %s159, 63
        %p162 = scmp.lt.s32.totalorder %s18, 0
        %s163 = scalar_select %p162, %s18, 0
        %s164 = sadd.s32 %s163, %s161
        %s165 = smul.addr %s164, 4
        %s166 = scalar_lea.vmem %s0, %s165
        %s167 = smul.u32 32, %s17
      $region24: #{darknet_conv.2} parent=19 // pred_fallthru
        _
    $region20: #{darknet_conv.2} parent=5 // pred_fallthru
      _
    %p168 = scmp.le.s32.totalorder 1, %s10
    %p169 = scmp.lt.s32.totalorder %s10, 3
    %p170 = pnand %p168, %p169
    %p171 = pneg %p170
    // Predicated region
    $region25: #{darknet_conv.2} parent=5 // pred_check
      _
    $region26: #{darknet_conv.2} parent=5 // pred_check_branch
      %173 = sbr.rel (%p170) target = $region28
    $region27: #{darknet_conv.2} parent=5 // pred_region
      %s174 = ssub.s32 %s10, 1
      %s175 = smul.u32 32, %s19
      %p176 = scmp.lt.s32.totalorder %s175, 63
      %s177 = scalar_select %p176, %s175, 63
      %p178 = scmp.lt.s32.totalorder %s20, 0
      %s179 = scalar_select %p178, %s20, 0
      %s180 = sadd.s32 %s179, %s177
      %s181 = smul.addr %s180, 4
      %s182 = scalar_lea.vmem %s0, %s181
      %p183 = pneg %p50
      %p184 = pneg %p47
      %s185 = smul.u32 5, %s20
      %p186 = scmp.lt.s32.totalorder %s185, 4
      %s187 = scalar_select %p186, %s185, 4
      %s188 = smul.addr %s187, 4
      %s189 = scalar_lea.vmem %s1, %s188
      %p190 = pneg %p76
      %p191 = pneg %p73
      %p192 = pneg %p102
      %p193 = pneg %p99
      %s194 = smul.u32 32, %s19
      %p195 = scmp.lt.s32.totalorder %s194, 63
      %s196 = scalar_select %p195, %s194, 63
      %s197 = smul.addr %s196, 8
      %s198 = scalar_lea.vmem %s2, %s197
      %p199 = pneg %p128
      %p200 = pneg %p125
      %p201 = scmp.lt.s32.totalorder %s19, 1
      %s202 = scalar_select %p201, %s19, 1
      %s203 = smul.addr %s202, 2
      %s204 = scalar_lea.vmem %s3, %s203
      %s205 = smul.u32 32, %s19
      %p206 = scmp.lt.s32.totalorder %s205, 63
      %s207 = scalar_select %p206, %s205, 63
      %p208 = scmp.lt.s32.totalorder %s20, 0
      %s209 = scalar_select %p208, %s20, 0
      %s210 = sadd.s32 %s209, %s207
      %s211 = smul.addr %s210, 4
      %s212 = scalar_lea.vmem %s0, %s211
      %s213 = smul.u32 32, %s19
      %s214 = smul.u32 5, %s20
      %p215 = scmp.lt.s32.totalorder %s214, 4
      %s216 = scalar_select %p215, %s214, 4
      %s217 = smul.addr %s216, 4
      %s218 = scalar_lea.vmem %s1, %s217
      %s219 = smul.u32 5, %s20
      %s220 = smul.u32 32, %s19
      %p221 = scmp.lt.s32.totalorder %s220, 63
      %s222 = scalar_select %p221, %s220, 63
      %s223 = smul.addr %s222, 8
      %s224 = scalar_lea.vmem %s2, %s223
      %s225 = smul.u32 32, %s19
      %p226 = scmp.lt.s32.totalorder %s19, 1
      %s227 = scalar_select %p226, %s19, 1
      %s228 = smul.addr %s227, 2
      %s229 = scalar_lea.vmem %s3, %s228
      %v231 = vld [vmem:[%s212] sm:$0xf]
      %v232 = vld [vmem:[%s212 + $0x4] sm:$0xf]
      %v233 = vld [vmem:[%s212 + $0x8] sm:$0xf]
      %v234 = vld [vmem:[%s212 + $0xc] sm:$0xf]
      %v235 = vld [vmem:[%s212 + $0x10] sm:$0xf]
      %v236 = vld [vmem:[%s212 + $0x14] sm:$0xf]
      %v237 = vld [vmem:[%s212 + $0x18] sm:$0xf]
      %v238 = vld [vmem:[%s212 + $0x1c] sm:$0xf]
      %v239 = vld [vmem:[%s212 + $0x20] sm:$0xf]
      %v240 = vld [vmem:[%s212 + $0x24] sm:$0xf]
      %v241 = vld [vmem:[%s212 + $0x28] sm:$0xf]
      %v242 = vld [vmem:[%s212 + $0x2c] sm:$0xf]
      %v243 = vld [vmem:[%s212 + $0x30] sm:$0xf]
      %v244 = vld [vmem:[%s212 + $0x34] sm:$0xf]
      %v245 = vld [vmem:[%s212 + $0x38] sm:$0xf]
      %v246 = vld [vmem:[%s212 + $0x3c] sm:$0xf]
      %v247 = vld [vmem:[%s212 + $0x40] sm:$0xf]
      %v248 = vld [vmem:[%s212 + $0x44] sm:$0xf]
      %v249 = vld [vmem:[%s212 + $0x48] sm:$0xf]
      %v250 = vld [vmem:[%s212 + $0x4c] sm:$0xf]
      %v251 = vld [vmem:[%s212 + $0x50] sm:$0xf]
      %v252 = vld [vmem:[%s212 + $0x54] sm:$0xf]
      %v253 = vld [vmem:[%s212 + $0x58] sm:$0xf]
      %v254 = vld [vmem:[%s212 + $0x5c] sm:$0xf]
      %v255 = vld [vmem:[%s212 + $0x60] sm:$0xf]
      %v256 = vld [vmem:[%s212 + $0x64] sm:$0xf]
      %v257 = vld [vmem:[%s212 + $0x68] sm:$0xf]
      %v258 = vld [vmem:[%s212 + $0x6c] sm:$0xf]
      %v259 = vld [vmem:[%s212 + $0x70] sm:$0xf]
      %v260 = vld [vmem:[%s212 + $0x74] sm:$0xf]
      %v261 = vld [vmem:[%s212 + $0x78] sm:$0xf]
      %v262 = vld [vmem:[%s212 + $0x7c] sm:$0xf]
      %v263 = vld [vmem:[%s218] sm:$0xf]
      %v264 = vld [vmem:[%s218 + $0x4] sm:$0xf]
      %v265 = vld [vmem:[%s218 + $0x8] sm:$0xf]
      %v266 = vld [vmem:[%s218 + $0xc] sm:$0xf]
      %v267 = vld [vmem:[%s218 + $0x10] sm:$0x3]
      %v300 = vunpack.c.l.b16 %v231
      %v301 = vunpack.c.l.b16 %v232
      %v302 = vunpack.c.l.b16 %v233
      %v303 = vunpack.c.l.b16 %v234
      %v304 = vunpack.c.l.b16 %v235
      %v305 = vunpack.c.l.b16 %v236
      %v306 = vunpack.c.l.b16 %v237
      %v307 = vunpack.c.l.b16 %v238
      %v308 = vunpack.c.l.b16 %v239
      %v309 = vunpack.c.l.b16 %v240
      %v310 = vunpack.c.l.b16 %v241
      %v311 = vunpack.c.l.b16 %v242
      %v312 = vunpack.c.l.b16 %v243
      %v313 = vunpack.c.l.b16 %v244
      %v314 = vunpack.c.l.b16 %v245
      %v315 = vunpack.c.l.b16 %v246
      %v316 = vunpack.c.l.b16 %v247
      %v317 = vunpack.c.l.b16 %v248
      %v318 = vunpack.c.l.b16 %v249
      %v319 = vunpack.c.l.b16 %v250
      %v320 = vunpack.c.l.b16 %v251
      %v321 = vunpack.c.l.b16 %v252
      %v322 = vunpack.c.l.b16 %v253
      %v323 = vunpack.c.l.b16 %v254
      %v324 = vunpack.c.l.b16 %v255
      %v325 = vunpack.c.l.b16 %v256
      %v326 = vunpack.c.l.b16 %v257
      %v327 = vunpack.c.l.b16 %v258
      %v328 = vunpack.c.l.b16 %v259
      %v329 = vunpack.c.l.b16 %v260
      %v330 = vunpack.c.l.b16 %v261
      %v331 = vunpack.c.l.b16 %v262
      %v332 = vpack.c.b16 %v301, %v300
      %v333 = vpack.c.b16 %v303, %v302
      %v334 = vpack.c.b16 %v305, %v304
      %v335 = vpack.c.b16 %v307, %v306
      %v336 = vpack.c.b16 %v309, %v308
      %v337 = vpack.c.b16 %v311, %v310
      %v338 = vpack.c.b16 %v313, %v312
      %v339 = vpack.c.b16 %v315, %v314
      %v340 = vpack.c.b16 %v317, %v316
      %v341 = vpack.c.b16 %v319, %v318
      %v342 = vpack.c.b16 %v321, %v320
      %v343 = vpack.c.b16 %v323, %v322
      %v344 = vpack.c.b16 %v325, %v324
      %v345 = vpack.c.b16 %v327, %v326
      %v346 = vpack.c.b16 %v329, %v328
      %v347 = vpack.c.b16 %v331, %v330
      %v353 = vunpack.c.l.b16 %v263
      %v354 = vunpack.c.l.b16 %v264
      %v355 = vunpack.c.l.b16 %v265
      %v356 = vunpack.c.l.b16 %v266
      %v357 = vunpack.c.l.b16 %v267
      %v358 = vpack.c.b16 %v354, %v353
      %v359 = vpack.c.b16 %v356, %v355
      %v360 = vpack.c.b16 %v357, %v357
      %vm363 = vcmask 293888
      %v365 = vsel %vm363, %v332, 0
      %v368 = vsel %vm363, %v333, 0
      %v371 = vsel %vm363, %v334, 0
      %v374 = vsel %vm363, %v335, 0
      %v377 = vsel %vm363, %v336, 0
      %v380 = vsel %vm363, %v337, 0
      %v383 = vsel %vm363, %v338, 0
      %v386 = vsel %vm363, %v339, 0
      %v389 = vsel %vm363, %v340, 0
      %v392 = vsel %vm363, %v341, 0
      %v395 = vsel %vm363, %v342, 0
      %v398 = vsel %vm363, %v343, 0
      %v401 = vsel %vm363, %v344, 0
      %v404 = vsel %vm363, %v345, 0
      %v407 = vsel %vm363, %v346, 0
      %v410 = vsel %vm363, %v347, 0
      %vm412 = vcmask 1041408
      %v414 = vsel %vm412, %v360, 0
      %416 = vmatprep.subr.bf16.mxu0 0
      %417 = vmatpush1.bf16.msra.mxu0 %v358
      %418 = vmatprep.subr.bf16.mxu0 0
      %419 = vmatpush1.bf16.msra.mxu0 %v359
      %420 = vmatprep.subr.bf16.mxu0 0
      %421 = vmatpush1.bf16.msra.mxu0 %v414
      %422 = vmatprep.subr.bf16.mxu0 0
      %423 = vmatpush1.bf16.msra.mxu0 0
      %424 = vmatprep.subr.bf16.mxu0 0
      %425 = vmatpush1.bf16.msra.mxu0 0
      %426 = vmatprep.subr.bf16.mxu0 0
      %427 = vmatpush1.bf16.msra.mxu0 0
      %428 = vmatprep.subr.bf16.mxu0 0
      %429 = vmatpush1.bf16.msra.mxu0 0
      %430 = vmatprep.subr.bf16.mxu0 0
      %431 = vmatpush1.bf16.msra.mxu0 0
      %432 = vmatprep.subr.bf16.mxu0 0
      %433 = vmatpush1.bf16.msra.mxu0 0
      %434 = vmatprep.subr.bf16.mxu0 0
      %435 = vmatpush1.bf16.msra.mxu0 0
      %436 = vmatprep.subr.bf16.mxu0 0
      %437 = vmatpush1.bf16.msra.mxu0 0
      %438 = vmatprep.subr.bf16.mxu0 0
      %439 = vmatpush1.bf16.msra.mxu0 0
      %440 = vmatprep.subr.bf16.mxu0 0
      %441 = vmatpush1.bf16.msra.mxu0 0
      %442 = vmatprep.subr.bf16.mxu0 0
      %443 = vmatpush1.bf16.msra.mxu0 0
      %444 = vmatprep.subr.bf16.mxu0 0
      %445 = vmatpush1.bf16.msra.mxu0 0
      %446 = vmatprep.subr.bf16.mxu0 0
      %447 = vmatpush1.bf16.msra.mxu0 0
      %448 = vmatprep.mubr.bf16.mxu0 0
      %449 = vmatmul.mubr.bf16.gmra.mrb[0].mxu0 %v365
      %v450 = vpop.f32.mrb[0].mxu0
      %v451 = vadd.f32 0.0, %v450
      %v452 = vpop.f32.mrb[0].mxu0
      %v453 = vpop.f32.mrb[0].mxu0
      %v454 = vadd.f32 0.0, %v453
      %v455 = vpop.f32.mrb[0].mxu0
      %456 = vmatprep.mubr.bf16.mxu0 0
      %457 = vmatmul.mubr.bf16.gmra.mrb[0].mxu0 %v368
      %v458 = vpop.f32.mrb[0].mxu0
      %v459 = vadd.f32 0.0, %v458
      %v460 = vpop.f32.mrb[0].mxu0
      %v461 = vpop.f32.mrb[0].mxu0
      %v462 = vadd.f32 0.0, %v461
      %v463 = vpop.f32.mrb[0].mxu0
      %464 = vmatprep.mubr.bf16.mxu0 0
      %465 = vmatmul.mubr.bf16.gmra.mrb[0].mxu0 %v371
      %v466 = vpop.f32.mrb[0].mxu0
      %v467 = vadd.f32 0.0, %v466
      %v468 = vpop.f32.mrb[0].mxu0
      %v469 = vpop.f32.mrb[0].mxu0
      %v470 = vadd.f32 0.0, %v469
      %v471 = vpop.f32.mrb[0].mxu0
      %472 = vmatprep.mubr.bf16.mxu0 0
      %473 = vmatmul.mubr.bf16.gmra.mrb[0].mxu0 %v374
      %v474 = vpop.f32.mrb[0].mxu0
      %v475 = vadd.f32 0.0, %v474
      %v476 = vpop.f32.mrb[0].mxu0
      %v477 = vpop.f32.mrb[0].mxu0
      %v478 = vadd.f32 0.0, %v477
      %v479 = vpop.f32.mrb[0].mxu0
      %480 = vmatprep.mubr.bf16.mxu0 0
      %481 = vmatmul.mubr.bf16.gmra.mrb[0].mxu0 %v377
      %v482 = vpop.f32.mrb[0].mxu0
      %v483 = vadd.f32 0.0, %v482
      %v484 = vpop.f32.mrb[0].mxu0
      %v485 = vpop.f32.mrb[0].mxu0
      %v486 = vadd.f32 0.0, %v485
      %v487 = vpop.f32.mrb[0].mxu0
      %488 = vmatprep.mubr.bf16.mxu0 0
      %489 = vmatmul.mubr.bf16.gmra.mrb[0].mxu0 %v380
      %v490 = vpop.f32.mrb[0].mxu0
      %v491 = vadd.f32 0.0, %v490
      %v492 = vpop.f32.mrb[0].mxu0
      %v493 = vpop.f32.mrb[0].mxu0
      %v494 = vadd.f32 0.0, %v493
      %v495 = vpop.f32.mrb[0].mxu0
      %496 = vmatprep.mubr.bf16.mxu0 0
      %497 = vmatmul.mubr.bf16.gmra.mrb[0].mxu0 %v383
      %v498 = vpop.f32.mrb[0].mxu0
      %v499 = vadd.f32 0.0, %v498
      %v500 = vpop.f32.mrb[0].mxu0
      %v501 = vpop.f32.mrb[0].mxu0
      %v502 = vadd.f32 0.0, %v501
      %v503 = vpop.f32.mrb[0].mxu0
      %504 = vmatprep.mubr.bf16.mxu0 0
      %505 = vmatmul.mubr.bf16.gmra.mrb[0].mxu0 %v386
      %v506 = vpop.f32.mrb[0].mxu0
      %v507 = vadd.f32 0.0, %v506
      %v508 = vpop.f32.mrb[0].mxu0
      %v509 = vpop.f32.mrb[0].mxu0
      %v510 = vadd.f32 0.0, %v509
      %v511 = vpop.f32.mrb[0].mxu0
      %512 = vmatprep.mubr.bf16.mxu0 0
      %513 = vmatmul.mubr.bf16.gmra.mrb[0].mxu0 %v389
      %v514 = vpop.f32.mrb[0].mxu0
      %v515 = vadd.f32 0.0, %v514
      %v516 = vpop.f32.mrb[0].mxu0
      %v517 = vpop.f32.mrb[0].mxu0
      %v518 = vadd.f32 0.0, %v517
      %v519 = vpop.f32.mrb[0].mxu0
      %520 = vmatprep.mubr.bf16.mxu0 0
      %521 = vmatmul.mubr.bf16.gmra.mrb[0].mxu0 %v392
      %v522 = vpop.f32.mrb[0].mxu0
      %v523 = vadd.f32 0.0, %v522
      %v524 = vpop.f32.mrb[0].mxu0
      %v525 = vpop.f32.mrb[0].mxu0
      %v526 = vadd.f32 0.0, %v525
      %v527 = vpop.f32.mrb[0].mxu0
      %528 = vmatprep.mubr.bf16.mxu0 0
      %529 = vmatmul.mubr.bf16.gmra.mrb[0].mxu0 %v395
      %v530 = vpop.f32.mrb[0].mxu0
      %v531 = vadd.f32 0.0, %v530
      %v532 = vpop.f32.mrb[0].mxu0
      %v533 = vpop.f32.mrb[0].mxu0
      %v534 = vadd.f32 0.0, %v533
      %v535 = vpop.f32.mrb[0].mxu0
      %536 = vmatprep.mubr.bf16.mxu0 0
      %537 = vmatmul.mubr.bf16.gmra.mrb[0].mxu0 %v398
      %v538 = vpop.f32.mrb[0].mxu0
      %v539 = vadd.f32 0.0, %v538
      %v540 = vpop.f32.mrb[0].mxu0
      %v541 = vpop.f32.mrb[0].mxu0
      %v542 = vadd.f32 0.0, %v541
      %v543 = vpop.f32.mrb[0].mxu0
      %544 = vmatprep.mubr.bf16.mxu0 0
      %545 = vmatmul.mubr.bf16.gmra.mrb[0].mxu0 %v401
      %v546 = vpop.f32.mrb[0].mxu0
      %v547 = vadd.f32 0.0, %v546
      %v548 = vpop.f32.mrb[0].mxu0
      %v549 = vpop.f32.mrb[0].mxu0
      %v550 = vadd.f32 0.0, %v549
      %v551 = vpop.f32.mrb[0].mxu0
      %552 = vmatprep.mubr.bf16.mxu0 0
      %553 = vmatmul.mubr.bf16.gmra.mrb[0].mxu0 %v404
      %v554 = vpop.f32.mrb[0].mxu0
      %v555 = vadd.f32 0.0, %v554
      %v556 = vpop.f32.mrb[0].mxu0
      %v557 = vpop.f32.mrb[0].mxu0
      %v558 = vadd.f32 0.0, %v557
      %v559 = vpop.f32.mrb[0].mxu0
      %560 = vmatprep.mubr.bf16.mxu0 0
      %561 = vmatmul.mubr.bf16.gmra.mrb[0].mxu0 %v407
      %v562 = vpop.f32.mrb[0].mxu0
      %v563 = vadd.f32 0.0, %v562
      %v564 = vpop.f32.mrb[0].mxu0
      %v565 = vpop.f32.mrb[0].mxu0
      %v566 = vadd.f32 0.0, %v565
      %v567 = vpop.f32.mrb[0].mxu0
      %568 = vmatprep.mubr.bf16.mxu0 0
      %569 = vmatmul.mubr.bf16.gmra.mrb[0].mxu0 %v410
      %v570 = vpop.f32.mrb[0].mxu0
      %v571 = vadd.f32 0.0, %v570
      %v572 = vpop.f32.mrb[0].mxu0
      %v573 = vpop.f32.mrb[0].mxu0
      %v574 = vadd.f32 0.0, %v573
      %v575 = vpop.f32.mrb[0].mxu0
      %576 = vdwg.mxu0
      %577 = vst [vmem:[%s224] sm:$0xff] %v451
      %578 = vst [vmem:[%s224 + $0x8] sm:$0xff] %v454
      %579 = vst [vmem:[%s224 + $0x10] sm:$0xff] %v459
      %580 = vst [vmem:[%s224 + $0x18] sm:$0xff] %v462
      %581 = vst [vmem:[%s224 + $0x20] sm:$0xff] %v467
      %582 = vst [vmem:[%s224 + $0x28] sm:$0xff] %v470
      %583 = vst [vmem:[%s224 + $0x30] sm:$0xff] %v475
      %584 = vst [vmem:[%s224 + $0x38] sm:$0xff] %v478
      %585 = vst [vmem:[%s224 + $0x40] sm:$0xff] %v483
      %586 = vst [vmem:[%s224 + $0x48] sm:$0xff] %v486
      %587 = vst [vmem:[%s224 + $0x50] sm:$0xff] %v491
      %588 = vst [vmem:[%s224 + $0x58] sm:$0xff] %v494
      %589 = vst [vmem:[%s224 + $0x60] sm:$0xff] %v499
      %590 = vst [vmem:[%s224 + $0x68] sm:$0xff] %v502
      %591 = vst [vmem:[%s224 + $0x70] sm:$0xff] %v507
      %592 = vst [vmem:[%s224 + $0x78] sm:$0xff] %v510
      %593 = vst [vmem:[%s224 + $0x80] sm:$0xff] %v515
      %594 = vst [vmem:[%s224 + $0x88] sm:$0xff] %v518
      %595 = vst [vmem:[%s224 + $0x90] sm:$0xff] %v523
      %596 = vst [vmem:[%s224 + $0x98] sm:$0xff] %v526
      %597 = vst [vmem:[%s224 + $0xa0] sm:$0xff] %v531
      %598 = vst [vmem:[%s224 + $0xa8] sm:$0xff] %v534
      %599 = vst [vmem:[%s224 + $0xb0] sm:$0xff] %v539
      %600 = vst [vmem:[%s224 + $0xb8] sm:$0xff] %v542
      %601 = vst [vmem:[%s224 + $0xc0] sm:$0xff] %v547
      %602 = vst [vmem:[%s224 + $0xc8] sm:$0xff] %v550
      %603 = vst [vmem:[%s224 + $0xd0] sm:$0xff] %v555
      %604 = vst [vmem:[%s224 + $0xd8] sm:$0xff] %v558
      %605 = vst [vmem:[%s224 + $0xe0] sm:$0xff] %v563
      %606 = vst [vmem:[%s224 + $0xe8] sm:$0xff] %v566
      %607 = vst [vmem:[%s224 + $0xf0] sm:$0xff] %v571
      %608 = vst [vmem:[%s224 + $0xf8] sm:$0xff] %v574
      %v609 = vadd.f32 %v451, %v454
      %v610 = vadd.f32 %v609, %v459
      %v611 = vadd.f32 %v610, %v462
      %v612 = vadd.f32 %v611, %v467
      %v613 = vadd.f32 %v612, %v470
      %v614 = vadd.f32 %v613, %v475
      %v615 = vadd.f32 %v614, %v478
      %v616 = vadd.f32 %v615, %v483
      %v617 = vadd.f32 %v616, %v486
      %v618 = vadd.f32 %v617, %v491
      %v619 = vadd.f32 %v618, %v494
      %v620 = vadd.f32 %v619, %v499
      %v621 = vadd.f32 %v620, %v502
      %v622 = vadd.f32 %v621, %v507
      %v623 = vadd.f32 %v622, %v510
      %v624 = vadd.f32 %v623, %v515
      %v625 = vadd.f32 %v624, %v518
      %v626 = vadd.f32 %v625, %v523
      %v627 = vadd.f32 %v626, %v526
      %v628 = vadd.f32 %v627, %v531
      %v629 = vadd.f32 %v628, %v534
      %v630 = vadd.f32 %v629, %v539
      %v631 = vadd.f32 %v630, %v542
      %v632 = vadd.f32 %v631, %v547
      %v633 = vadd.f32 %v632, %v550
      %v634 = vadd.f32 %v633, %v555
      %v635 = vadd.f32 %v634, %v558
      %v636 = vadd.f32 %v635, %v563
      %v637 = vadd.f32 %v636, %v566
      %v638 = vadd.f32 %v637, %v571
      %v639 = vadd.f32 %v638, %v574
      %v640 = vrot.slane %v639, 4
      %v641 = vadd.f32 %v639, %v640
      %v642 = vrot.slane %v641, 2
      %v643 = vadd.f32 %v641, %v642
      %v644 = vrot.slane %v643, 1
      %v645 = vadd.f32 %v643, %v644
      %v646 = vmul.f32 %v451, %v451
      %v647 = vmul.f32 %v454, %v454
      %v648 = vmul.f32 %v459, %v459
      %v649 = vmul.f32 %v462, %v462
      %v650 = vmul.f32 %v467, %v467
      %v651 = vmul.f32 %v470, %v470
      %v652 = vmul.f32 %v475, %v475
      %v653 = vmul.f32 %v478, %v478
      %v654 = vmul.f32 %v483, %v483
      %v655 = vmul.f32 %v486, %v486
      %v656 = vmul.f32 %v491, %v491
      %v657 = vmul.f32 %v494, %v494
      %v658 = vmul.f32 %v499, %v499
      %v659 = vmul.f32 %v502, %v502
      %v660 = vmul.f32 %v507, %v507
      %v661 = vmul.f32 %v510, %v510
      %v662 = vmul.f32 %v515, %v515
      %v663 = vmul.f32 %v518, %v518
      %v664 = vmul.f32 %v523, %v523
      %v665 = vmul.f32 %v526, %v526
      %v666 = vmul.f32 %v531, %v531
      %v667 = vmul.f32 %v534, %v534
      %v668 = vmul.f32 %v539, %v539
      %v669 = vmul.f32 %v542, %v542
      %v670 = vmul.f32 %v547, %v547
      %v671 = vmul.f32 %v550, %v550
      %v672 = vmul.f32 %v555, %v555
      %v673 = vmul.f32 %v558, %v558
      %v674 = vmul.f32 %v563, %v563
      %v675 = vmul.f32 %v566, %v566
      %v676 = vmul.f32 %v571, %v571
      %v677 = vmul.f32 %v574, %v574
      %v678 = vadd.f32 %v646, %v647
      %v679 = vadd.f32 %v678, %v648
      %v680 = vadd.f32 %v679, %v649
      %v681 = vadd.f32 %v680, %v650
      %v682 = vadd.f32 %v681, %v651
      %v683 = vadd.f32 %v682, %v652
      %v684 = vadd.f32 %v683, %v653
      %v685 = vadd.f32 %v684, %v654
      %v686 = vadd.f32 %v685, %v655
      %v687 = vadd.f32 %v686, %v656
      %v688 = vadd.f32 %v687, %v657
      %v689 = vadd.f32 %v688, %v658
      %v690 = vadd.f32 %v689, %v659
      %v691 = vadd.f32 %v690, %v660
      %v692 = vadd.f32 %v691, %v661
      %v693 = vadd.f32 %v692, %v662
      %v694 = vadd.f32 %v693, %v663
      %v695 = vadd.f32 %v694, %v664
      %v696 = vadd.f32 %v695, %v665
      %v697 = vadd.f32 %v696, %v666
      %v698 = vadd.f32 %v697, %v667
      %v699 = vadd.f32 %v698, %v668
      %v700 = vadd.f32 %v699, %v669
      %v701 = vadd.f32 %v700, %v670
      %v702 = vadd.f32 %v701, %v671
      %v703 = vadd.f32 %v702, %v672
      %v704 = vadd.f32 %v703, %v673
      %v705 = vadd.f32 %v704, %v674
      %v706 = vadd.f32 %v705, %v675
      %v707 = vadd.f32 %v706, %v676
      %v708 = vadd.f32 %v707, %v677
      %v709 = vrot.slane %v708, 4
      %v710 = vadd.f32 %v708, %v709
      %v711 = vrot.slane %v710, 2
      %v712 = vadd.f32 %v710, %v711
      %v713 = vrot.slane %v712, 1
      %v714 = vadd.f32 %v712, %v713
      %vm715 = vcmask 1040384
      %v716 = vsel %vm715, %v645, %v714
      %717 = vst [vmem:[%s229] sm:$0x3] %v716
      %s718 = smul.u32 32, %s19
      %p719 = scmp.lt.s32.totalorder %s718, 63
      %s720 = scalar_select %p719, %s718, 63
      %s721 = smul.addr %s720, 8
      %s722 = scalar_lea.vmem %s2, %s721
      %p723 = scmp.lt.s32.totalorder %s19, 1
      %s724 = scalar_select %p723, %s19, 1
      %s725 = smul.addr %s724, 2
      %s726 = scalar_lea.vmem %s3, %s725
      // Predicated region
      $region29: #{darknet_conv.2} parent=27 // pred_check
        %p727 = pneg %p99
      $region30: #{darknet_conv.2} parent=27 // pred_check_branch
        %729 = sbr.rel (%p727) target = $region32
      $region31: #{darknet_conv.2} parent=27 // pred_region
        %s730 = smul.u32 32, %s19
      $region32: #{darknet_conv.2} parent=27 // pred_fallthru
        _
      // Predicated region
      $region33: #{darknet_conv.2} parent=27 // pred_check
        %p731 = pneg %p125
      $region34: #{darknet_conv.2} parent=27 // pred_check_branch
        %733 = sbr.rel (%p731) target = $region36
      $region35: #{darknet_conv.2} parent=27 // pred_region
        _
      $region36: #{darknet_conv.2} parent=27 // pred_fallthru
        _
    $region28: #{darknet_conv.2} parent=5 // pred_fallthru
      _
    %p734 = scmp.le.s32.totalorder 2, %s10
    // Predicated region
    $region37: #{darknet_conv.2} parent=5 // pred_check
      %p735 = pneg %p734
    $region38: #{darknet_conv.2} parent=5 // pred_check_branch
      %737 = sbr.rel (%p735) target = $region40
    $region39: #{darknet_conv.2} parent=5 // pred_region
      %s738 = ssub.s32 %s10, 2
      // Predicated region
      $region41: #{darknet_conv.2} parent=39 // pred_check
        %p739 = pneg %p105
      $region42: #{darknet_conv.2} parent=39 // pred_check_branch
        %741 = sbr.rel (%p739) target = $region44
      $region43: #{darknet_conv.2} parent=39 // pred_region
        %s742 = smul.u32 32, %s21
        %p743 = scmp.lt.s32.totalorder %s742, 63
        %s744 = scalar_select %p743, %s742, 63
        %s745 = smul.addr %s744, 8
        %s746 = scalar_lea.vmem %s2, %s745
      $region44: #{darknet_conv.2} parent=39 // pred_fallthru
        _
      // Predicated region
      $region45: #{darknet_conv.2} parent=39 // pred_check
        %p747 = pneg %p131
      $region46: #{darknet_conv.2} parent=39 // pred_check_branch
        %749 = sbr.rel (%p747) target = $region48
      $region47: #{darknet_conv.2} parent=39 // pred_region
        %p750 = scmp.lt.s32.totalorder %s21, 1
        %s751 = scalar_select %p750, %s21, 1
        %s752 = smul.addr %s751, 2
        %s753 = scalar_lea.vmem %s3, %s752
      $region48: #{darknet_conv.2} parent=39 // pred_fallthru
        _
    $region40: #{darknet_conv.2} parent=5 // pred_fallthru
      _
  $region6: #{darknet_conv.2} parent=0 // loop_footer
    %s14 = sadd.s32 1, %s10
  $region7: #{darknet_conv.2} parent=0 // loop_footer_branch
    %9 = sbr.rel target = $region3
  $region8: #{darknet_conv.2} parent=0 // loop_exit
    _

</llo_original>
